<compile_context>
chip_gen: v7x
topology: tpu7x:2x2x1
jax: 0.10.0
libtpu: 0.0.40
codegen_flags: <defaults>
</compile_context>

<pallas_src>
import functools

import jax
import jax.numpy as jnp
from jax.experimental import pallas as pl
from jax.experimental.pallas import tpu as pltpu


def _round_up(x, m):
    return (x + m - 1) // m * m


# ---------------------------------------------------------------------------
# Pass 1 kernel: one K=128 MXU matmul per tile + output-side degree gating
# + per-tile BatchNorm partial statistics.
# ---------------------------------------------------------------------------
def _gdc_matmul_kernel(x_ref, onehot_ref, w_ref, act_ref, stats_ref,
                       *, num_degrees, output_size):
    # [T, K_pad] bf16 @ [K_pad, out_cols] bf16 -> [T, out_cols] f32
    y = jnp.dot(x_ref[...], w_ref[...], preferred_element_type=jnp.float32)
    onehot = onehot_ref[...]                          # [T, D] f32

    # Output-side gating, all in f32 (cheap VPU/XLU work; v5e-safe).
    act = y[:, :output_size]                          # self block
    for d in range(num_degrees):
        blk = y[:, (d + 1) * output_size:(d + 2) * output_size]
        act = act + onehot[:, d:d + 1] * blk
    # NOTE: module bias is omitted — it is added before BatchNorm(affine=False)
    # and cancels exactly under the mean subtraction.

    act_ref[...] = act.astype(jnp.bfloat16)           # narrow bf16 intermediate

    # Per-tile partials for the cross-tile BatchNorm reduction (f32 source).
    # TODO(synk): for very large N switch to mean-centered (Chan) partials to
    # avoid catastrophic cancellation in var = E[x^2] - E[x]^2.
    s = jnp.sum(act, axis=0, keepdims=True)           # [1, O]
    ss = jnp.sum(act * act, axis=0, keepdims=True)    # [1, O]
    stats_ref[...] = jnp.concatenate([s, ss], axis=0)[None]   # [1, 2, O]


def graph_degree_conv(node_repr, summed, onehot, w_self, w_deg,
                      *, tile_n=512, eps=1e-5):
    """Forward pass of GraphDegreeConv (batch_normalize=True, batch stats).

    node_repr : [N, node_size] f32
    summed    : [N, node_size+edge_size] f32  (neighbor||edge feats, pre-summed)
    onehot    : [N, num_degrees] f32          (degree one-hot per node)
    w_self    : [node_size, output_size] f32
    w_deg     : [num_degrees, node_size+edge_size, output_size] f32
    returns   : [N, output_size] f32
    """
    n, node_size = node_repr.shape
    num_degrees, feat_size, output_size = w_deg.shape
    assert summed.shape == (n, feat_size)
    assert onehot.shape == (n, num_degrees)

    k_real = node_size + feat_size                       # 72 in the demo
    k_pad = _round_up(k_real, 128)                       # 128
    out_cols = _round_up((num_degrees + 1) * output_size, 128)   # 96 -> 128

    # ---- tile sizing -------------------------------------------------------
    # Large tiles amortize the ~0.35 us/step overhead; cap so num_tiles >= 2
    # when possible (v7x has 2 TensorCores sharing the 'parallel' axis).
    tile_n = min(tile_n, n)
    if n >= 32 and tile_n > n // 2:
        tile_n = n // 2
    tile_n = max(16, (tile_n // 16) * 16)                # bf16 sublane packing
    while tile_n > 16 and n % tile_n:
        tile_n -= 16
    # N is NOT padded: padded rows would corrupt the BN statistics.
    assert n % tile_n == 0 and tile_n % 16 == 0, (n, tile_n)
    num_tiles = n // tile_n

    # ---- fused lane-dense bf16 LHS: [node || summed], padded K -> 128 ------
    x = jnp.concatenate([node_repr.astype(jnp.float32),
                         summed.astype(jnp.float32)], axis=1)
    x = jnp.pad(x, ((0, 0), (0, k_pad - k_real))).astype(jnp.bfloat16)
    onehot = onehot.astype(jnp.float32)

    # ---- block-structured combined weight (resident in VMEM, ~32 KB bf16) --
    w_comb = jnp.zeros((k_pad, out_cols), jnp.float32)
    w_comb = w_comb.at[:node_size, :output_size].set(w_self.astype(jnp.float32))
    for d in range(num_degrees):
        w_comb = w_comb.at[node_size:k_real,
                           (d + 1) * output_size:(d + 2) * output_size].set(
            w_deg[d].astype(jnp.float32))
    w_comb = w_comb.astype(jnp.bfloat16)

    cost = pl.CostEstimate(
        flops=2 * n * k_pad * out_cols + 4 * n * num_degrees * output_size,
        transcendentals=0,
        bytes_accessed=(2 * n * k_pad                       # bf16 fused LHS
                        + 4 * n * num_degrees                # onehot
                        + 2 * k_pad * out_cols               # bf16 weight
                        + 2 * n * output_size                # bf16 act out
                        + 4 * num_tiles * 2 * output_size))  # stats out

    # ---- pass 1: tiled fused matmul + gating + partial BN stats ------------
    act, partial_stats = pl.pallas_call(
        functools.partial(_gdc_matmul_kernel,
                          num_degrees=num_degrees, output_size=output_size),
        out_shape=(jax.ShapeDtypeStruct((n, output_size), jnp.bfloat16),
                   jax.ShapeDtypeStruct((num_tiles, 2, output_size),
                                        jnp.float32)),
        grid_spec=pltpu.PrefetchScalarGridSpec(
            num_scalar_prefetch=0,
            grid=(num_tiles,),
            in_specs=[
                # Optional (v6e): pipeline_mode=pl.Buffered(3) here if the
                # profile shows exposed DMA on the streamed rows.
                pl.BlockSpec((tile_n, k_pad), lambda i: (i, 0)),
                pl.BlockSpec((tile_n, num_degrees), lambda i: (i, 0)),
                pl.BlockSpec((k_pad, out_cols), lambda i: (0, 0)),  # resident W
            ],
            out_specs=[
                pl.BlockSpec((tile_n, output_size), lambda i: (i, 0)),
                pl.BlockSpec((1, 2, output_size), lambda i: (i, 0, 0)),
            ],
        ),
        compiler_params=pltpu.CompilerParams(
            dimension_semantics=("parallel",)),
        cost_estimate=cost,
    )(x, onehot, w_comb)

    # ---- pass 2 (plain XLA): cross-tile BN reduction + normalize + ReLU ----
    stats = jnp.sum(partial_stats, axis=0)               # [2, O] f32
    mean = stats[0] * (1.0 / n)
    var = jnp.maximum(stats[1] * (1.0 / n) - mean * mean, 0.0)
    inv_std = jax.lax.rsqrt(var + eps)
    return jnp.maximum((act.astype(jnp.float32) - mean) * inv_std, 0.0)


if __name__ == "__main__":
    # ----- module hyper-parameters (small, consistent with the module) -----
    node_size = 32
    edge_size = 8
    output_size = 16
    degree_list = [0, 1, 2, 3, 4]
    feat_size = node_size + edge_size
    num_degrees = len(degree_list)
    max_degree = max(degree_list)

    # ----- synthetic graph: nodes sorted by degree (as the original module's
    # torch.cat-over-degrees ordering assumes) -------------------------------
    N = 256
    node_degrees = [min(max_degree, (i * num_degrees) // N) for i in range(N)]
    n_edges = sum(node_degrees)

    nbr_idx, edge_idx, nbr_mask = [], [], []
    e_counter = 0
    for i, d in enumerate(node_degrees):
        row_n, row_e, row_m = [], [], []
        for k in range(max_degree):
            if k < d:
                row_n.append((i + k + 1) % N)
                row_e.append(e_counter)
                row_m.append(1.0)
                e_counter += 1
            else:
                row_n.append(0)
                row_e.append(0)
                row_m.append(0.0)
        nbr_idx.append(row_n)
        edge_idx.append(row_e)
        nbr_mask.append(row_m)
    nbr_idx = jnp.asarray(nbr_idx, dtype=jnp.int32)               # [N, Dmax]
    edge_idx = jnp.asarray(edge_idx, dtype=jnp.int32)             # [N, Dmax]
    nbr_mask = jnp.asarray(nbr_mask, dtype=jnp.float32)           # [N, Dmax]

    deg_arr = jnp.asarray(node_degrees, dtype=jnp.int32)
    degree_vals = jnp.asarray(degree_list, dtype=jnp.int32)
    onehot = (deg_arr[:, None] == degree_vals[None, :]).astype(jnp.float32)

    # ----- deterministic inputs & parameters --------------------------------
    key = jax.random.PRNGKey(0)
    k1, k2, k3, k4 = jax.random.split(key, 4)
    node_repr = jax.random.normal(k1, (N, node_size), dtype=jnp.float32)
    edge_repr = jax.random.normal(k2, (n_edges, edge_size), dtype=jnp.float32)

    b_self = 1.0 / jnp.sqrt(jnp.float32(node_size))
    w_self = jax.random.uniform(k3, (node_size, output_size),
                                minval=-b_self, maxval=b_self,
                                dtype=jnp.float32)
    b_deg = 1.0 / jnp.sqrt(jnp.float32(feat_size))
    w_deg = jax.random.uniform(k4, (num_degrees, feat_size, output_size),
                               minval=-b_deg, maxval=b_deg, dtype=jnp.float32)
    # Module bias is initialized to zeros and, with batch_normalize=True,
    # cancels exactly under BatchNorm(affine=False) — dropped from the kernel.

    # ----- plain-JAX glue: gather + pre-reduce the neighbor axis ------------
    # TODO(synk): data-dependent neighbor/edge gather stays in XLA; Pallas only
    # sees the already-reduced [N, F] `summed` tensor.
    m = nbr_mask[:, :, None]
    summed = jnp.concatenate(
        [jnp.sum(node_repr[nbr_idx] * m, axis=1),
         jnp.sum(edge_repr[edge_idx] * m, axis=1)], axis=1)       # [N, F]

    # ----- run the Pallas kernel ---------------------------------------------
    out = graph_degree_conv(node_repr, summed, onehot, w_self, w_deg,
                            tile_n=512)
    out = jax.block_until_ready(out)
    assert out.shape == (N, output_size)

    # ----- f32 plain-JAX reference (tolerance covers bf16 MXU operands) -----
    nbr_repr = jnp.einsum('nd,nf,dfo->no', onehot, summed, w_deg)
    act_ref = node_repr @ w_self + nbr_repr          # bias = 0 (and cancels in BN)
    act_ref = (act_ref - act_ref.mean(axis=0)) * jax.lax.rsqrt(
        act_ref.var(axis=0) + 1e-5)
    ref = jnp.maximum(act_ref, 0.0)
    max_err = float(jnp.max(jnp.abs(out - ref)))
    assert max_err < 1e-1, max_err

    print("KERNEL_OK")
</pallas_src>

<mosaic_0001>
module attributes {stable_mosaic.version = 11 : i64} {
  func.func @_gdc_matmul_kernel(%arg0: i32, %arg1: memref<128x128xbf16, #tpu.memory_space<vmem>>, %arg2: memref<128x5xf32, #tpu.memory_space<vmem>>, %arg3: memref<128x128xbf16, #tpu.memory_space<vmem>>, %arg4: memref<128x16xbf16, #tpu.memory_space<vmem>>, %arg5: memref<1x2x16xf32, #tpu.memory_space<vmem>>) attributes {dimension_semantics = [#tpu.dimension_semantics<parallel>], iteration_bounds = array<i64: 2>, scalar_prefetch = 0 : i64, scratch_operands = 0 : i64, tpu.core_type = #tpu.core_type<tc>, window_params = [{transform_indices = @transform_0, window_bounds = array<i64: 128, 128>}, {transform_indices = @transform_1, window_bounds = array<i64: 128, 5>}, {pipeline_mode = #tpu.pipeline_mode<synchronous>, transform_indices = @transform_2, window_bounds = array<i64: 128, 128>}, {transform_indices = @transform_3, window_bounds = array<i64: 128, 16>}, {transform_indices = @transform_4, window_bounds = array<i64: 1, 2, 16>}]} {
    %c0 = arith.constant 0 : index
    %c0_0 = arith.constant 0 : index
    %0 = vector.load %arg1[%c0, %c0_0] : memref<128x128xbf16, #tpu.memory_space<vmem>>, vector<128x128xbf16>
    %c0_1 = arith.constant 0 : index
    %c0_2 = arith.constant 0 : index
    %1 = vector.load %arg3[%c0_1, %c0_2] : memref<128x128xbf16, #tpu.memory_space<vmem>>, vector<128x128xbf16>
    %cst = arith.constant dense<0.000000e+00> : vector<128x128xf32>
    %2 = tpu.matmul %0, %1, %cst {dimension_numbers = #tpu.dot_dimension_numbers<[1], [0], [0], [1], [0, 0, 1, 1], [], []>} : vector<128x128xbf16>, vector<128x128xbf16>, vector<128x128xf32> -> vector<128x128xf32>
    %c0_3 = arith.constant 0 : index
    %c0_4 = arith.constant 0 : index
    %3 = vector.load %arg2[%c0_3, %c0_4] : memref<128x5xf32, #tpu.memory_space<vmem>>, vector<128x5xf32>
    %4 = vector.extract_strided_slice %2 {offsets = [0, 0], sizes = [128, 16], strides = [1, 1]} : vector<128x128xf32> to vector<128x16xf32>
    %5 = vector.extract_strided_slice %2 {offsets = [0, 16], sizes = [128, 16], strides = [1, 1]} : vector<128x128xf32> to vector<128x16xf32>
    %6 = vector.extract_strided_slice %3 {offsets = [0, 0], sizes = [128, 1], strides = [1, 1]} : vector<128x5xf32> to vector<128x1xf32>
    %7 = vector.broadcast %6 : vector<128x1xf32> to vector<128x16xf32>
    %8 = arith.mulf %7, %5 : vector<128x16xf32>
    %9 = arith.addf %4, %8 : vector<128x16xf32>
    %10 = vector.extract_strided_slice %2 {offsets = [0, 32], sizes = [128, 16], strides = [1, 1]} : vector<128x128xf32> to vector<128x16xf32>
    %11 = vector.extract_strided_slice %3 {offsets = [0, 1], sizes = [128, 1], strides = [1, 1]} : vector<128x5xf32> to vector<128x1xf32>
    %12 = vector.broadcast %11 : vector<128x1xf32> to vector<128x16xf32>
    %13 = arith.mulf %12, %10 : vector<128x16xf32>
    %14 = arith.addf %9, %13 : vector<128x16xf32>
    %15 = vector.extract_strided_slice %2 {offsets = [0, 48], sizes = [128, 16], strides = [1, 1]} : vector<128x128xf32> to vector<128x16xf32>
    %16 = vector.extract_strided_slice %3 {offsets = [0, 2], sizes = [128, 1], strides = [1, 1]} : vector<128x5xf32> to vector<128x1xf32>
    %17 = vector.broadcast %16 : vector<128x1xf32> to vector<128x16xf32>
    %18 = arith.mulf %17, %15 : vector<128x16xf32>
    %19 = arith.addf %14, %18 : vector<128x16xf32>
    %20 = vector.extract_strided_slice %2 {offsets = [0, 64], sizes = [128, 16], strides = [1, 1]} : vector<128x128xf32> to vector<128x16xf32>
    %21 = vector.extract_strided_slice %3 {offsets = [0, 3], sizes = [128, 1], strides = [1, 1]} : vector<128x5xf32> to vector<128x1xf32>
    %22 = vector.broadcast %21 : vector<128x1xf32> to vector<128x16xf32>
    %23 = arith.mulf %22, %20 : vector<128x16xf32>
    %24 = arith.addf %19, %23 : vector<128x16xf32>
    %25 = vector.extract_strided_slice %2 {offsets = [0, 80], sizes = [128, 16], strides = [1, 1]} : vector<128x128xf32> to vector<128x16xf32>
    %26 = vector.extract_strided_slice %3 {offsets = [0, 4], sizes = [128, 1], strides = [1, 1]} : vector<128x5xf32> to vector<128x1xf32>
    %27 = vector.broadcast %26 : vector<128x1xf32> to vector<128x16xf32>
    %28 = arith.mulf %27, %25 : vector<128x16xf32>
    %29 = arith.addf %24, %28 : vector<128x16xf32>
    %30 = arith.truncf %29 : vector<128x16xf32> to vector<128x16xbf16>
    %c0_5 = arith.constant 0 : index
    %c0_6 = arith.constant 0 : index
    %31 = vector.load %arg4[%c0_5, %c0_6] : memref<128x16xbf16, #tpu.memory_space<vmem>>, vector<128x16xbf16>
    tpu.vector_store %arg4[%c0_5, %c0_6], %30 {strides = array<i32>} : memref<128x16xbf16, #tpu.memory_space<vmem>>, vector<128x16xbf16>,
    %cst_7 = arith.constant dense<0.000000e+00> : vector<16xf32>
    %32 = vector.multi_reduction <add>, %29, %cst_7 [0] : vector<128x16xf32> to vector<16xf32>
    %33 = vector.shape_cast %32 : vector<16xf32> to vector<1x16xf32>
    %34 = arith.mulf %29, %29 : vector<128x16xf32>
    %cst_8 = arith.constant dense<0.000000e+00> : vector<16xf32>
    %35 = vector.multi_reduction <add>, %34, %cst_8 [0] : vector<128x16xf32> to vector<16xf32>
    %36 = vector.shape_cast %35 : vector<16xf32> to vector<1x16xf32>
    %37 = tpu.concatenate %33, %36 in 0 : vector<1x16xf32>, vector<1x16xf32> -> vector<2x16xf32>
    %38 = vector.shape_cast %37 : vector<2x16xf32> to vector<1x2x16xf32>
    %c0_9 = arith.constant 0 : index
    %c0_10 = arith.constant 0 : index
    %c0_11 = arith.constant 0 : index
    %39 = vector.load %arg5[%c0_9, %c0_10, %c0_11] : memref<1x2x16xf32, #tpu.memory_space<vmem>>, vector<1x2x16xf32>
    tpu.vector_store %arg5[%c0_9, %c0_10, %c0_11], %38 {strides = array<i32>} : memref<1x2x16xf32, #tpu.memory_space<vmem>>, vector<1x2x16xf32>,
    return
  }
  func.func @transform_0(%arg0: i32) -> (i32, i32) {
    %c0_i32 = arith.constant 0 : i32
    %c0_i32_0 = arith.constant 0 : i32
    return %arg0, %c0_i32 : i32, i32
  }
  func.func @transform_1(%arg0: i32) -> (i32, i32) {
    %c0_i32 = arith.constant 0 : i32
    %c0_i32_0 = arith.constant 0 : i32
    return %arg0, %c0_i32 : i32, i32
  }
  func.func @transform_2(%arg0: i32) -> (i32, i32) {
    %c0_i32 = arith.constant 0 : i32
    %c0_i32_0 = arith.constant 0 : i32
    %c0_i32_1 = arith.constant 0 : i32
    return %c0_i32, %c0_i32_0 : i32, i32
  }
  func.func @transform_3(%arg0: i32) -> (i32, i32) {
    %c0_i32 = arith.constant 0 : i32
    %c0_i32_0 = arith.constant 0 : i32
    return %arg0, %c0_i32 : i32, i32
  }
  func.func @transform_4(%arg0: i32) -> (i32, i32, i32) {
    %c0_i32 = arith.constant 0 : i32
    %c0_i32_0 = arith.constant 0 : i32
    %c0_i32_1 = arith.constant 0 : i32
    return %arg0, %c0_i32, %c0_i32_0 : i32, i32, i32
  }
}

</mosaic_0001>

<llo_original>
// kernel: tpu_custom_call.1
$region0: #{tpu_custom_call.1}
  #allocation0 [shape = 'u32[]', space=smem, size = 0x4, offset = 0x4, fixed_abs, tag = 'smem constant byte address 0x4 - core index']
  #allocation1 [shape = 'u32[144,128]{1,0:T(1,128)}', space=vmem, size = 0x12000, scoped, tag = 'internal scratch']
  %s0 = inlined_call_operand.vmem [shape: bf16[256,128], index: 0, kind: input, shape index: {}]
  %s1 = inlined_call_operand.vmem [shape: f32[256,5], index: 1, kind: input, shape index: {}]
  %s2 = inlined_call_operand.vmem [shape: bf16[128,128], index: 2, kind: input, shape index: {}]
  %s3 = inlined_call_operand.vmem [shape: bf16[256,16], index: 3, kind: output, shape index: {0}]
  %s4 = inlined_call_operand.hbm [shape: f32[2,2,16], index: 4, kind: output, shape index: {1}]
  %5 = xla_tuple %s3, %s4
  %s6 = sld [smem:[#allocation0]]
  $region53: #{tpu_custom_call.1} parent=0
    _
  %s8 = ssub.s32 1, %s6
  %s9 = scalar_select 0, %s8, %s6
  $region1: #{tpu_custom_call.1} parent=0
    #allocation2 [shape = 'u8[2048]{0}', space=vmem, size = 0x800, scoped, tag = 'output window, operand 1']
    #allocation3 [shape = 's32[2]{0}', space=sflag, size = 0x8, scoped, tag = 'scoped memory for tpu_custom_call.1']
    %10 = vsyncpa [#allocation3], 0
    %s11 = scalar_lea.sflag [#allocation3], 1
    %12 = vsyncpa %s11, 0
    loop: start=0, step=1, limit=4
    $region2: #{tpu_custom_call.1} parent=1 // loop_pre_header
      _
    $region3: #{tpu_custom_call.1} parent=1 // loop_header
      %s14 = sphi 0, %s18
      %p15 = scmp.ge.s32.totalorder %s14, 4
      %s24 = sphi 0, %s26
      %s27 = sphi 0, %s24
      %s28 = sphi 0, %s27
      %s44 = sphi 0, %s28
      %s50 = sphi 0, %s52
      %s53 = sphi 0, %s50
      %s54 = sphi 0, %s53
      %s70 = sphi 0, %s54
      %s74 = sphi 0, %s74
      %s76 = sphi 0, %s74
      %s77 = sphi 0, %s76
      %s91 = sphi 0, %s77
      %s97 = sphi 0, %s99
      %s100 = sphi 0, %s97
      %s101 = sphi 0, %s100
      %s117 = sphi 0, %s101
      %s123 = sphi 0, %s125
      %s126 = sphi 0, %s123
      %s127 = sphi 0, %s126
      %s143 = sphi 0, %s127
    $region4: #{tpu_custom_call.1} parent=1 // loop_header_branch
      %17 = sbr.rel (%p15) target = $region8
    $region5: #{tpu_custom_call.1} parent=1 // loop_body
      %s19 = ssub.s32 %s14, 1
      %s20 = ssub.s32 %s14, 2
      %s21 = sadd.s32 %s14, 1
      %s22 = ssub.s32 %s14, %s21
      %p23 = scmp.eq.s32.totalorder %s22, 0
      %s25 = sadd.s32 %s24, 1
      %s26 = scalar_select %p23, %s24, %s25
      %p29 = pneg %p23
      %p30 = scmp.eq.s32.totalorder %s14, 1
      %p31 = por %p29, %p30
      %p32 = scmp.ne.s32.totalorder %s24, %s27
      %p33 = scmp.eq.s32.totalorder %s14, 0
      %p34 = por %p32, %p33
      %p35 = scmp.ne.s32.totalorder %s24, %s27
      %p36 = scmp.eq.s32.totalorder %s19, 1
      %p37 = por %p35, %p36
      %p38 = scmp.ne.s32.totalorder %s27, %s28
      %p39 = scmp.eq.s32.totalorder %s19, 0
      %p40 = por %p38, %p39
      %p41 = scmp.ne.s32.totalorder %s27, %s28
      %p42 = scmp.eq.s32.totalorder %s20, 1
      %p43 = por %p41, %p42
      %p45 = scmp.ne.s32.totalorder %s28, %s44
      %p46 = scmp.eq.s32.totalorder %s20, 0
      %p47 = por %p45, %p46
      %s48 = ssub.s32 %s14, %s21
      %p49 = scmp.eq.s32.totalorder %s48, 0
      %s51 = sadd.s32 %s50, 1
      %s52 = scalar_select %p49, %s50, %s51
      %p55 = pneg %p49
      %p56 = scmp.eq.s32.totalorder %s14, 1
      %p57 = por %p55, %p56
      %p58 = scmp.ne.s32.totalorder %s50, %s53
      %p59 = scmp.eq.s32.totalorder %s14, 0
      %p60 = por %p58, %p59
      %p61 = scmp.ne.s32.totalorder %s50, %s53
      %p62 = scmp.eq.s32.totalorder %s19, 1
      %p63 = por %p61, %p62
      %p64 = scmp.ne.s32.totalorder %s53, %s54
      %p65 = scmp.eq.s32.totalorder %s19, 0
      %p66 = por %p64, %p65
      %p67 = scmp.ne.s32.totalorder %s53, %s54
      %p68 = scmp.eq.s32.totalorder %s20, 1
      %p69 = por %p67, %p68
      %p71 = scmp.ne.s32.totalorder %s54, %s70
      %p72 = scmp.eq.s32.totalorder %s20, 0
      %p73 = por %p71, %p72
      %s75 = sadd.s32 %s74, 1
      %p78 = scmp.eq.s32.totalorder %s14, 1
      %p79 = scmp.ne.s32.totalorder %s74, %s76
      %p80 = scmp.eq.s32.totalorder %s14, 0
      %p81 = por %p79, %p80
      %p82 = scmp.ne.s32.totalorder %s74, %s76
      %p83 = scmp.eq.s32.totalorder %s19, 1
      %p84 = por %p82, %p83
      %p85 = scmp.ne.s32.totalorder %s76, %s77
      %p86 = scmp.eq.s32.totalorder %s19, 0
      %p87 = por %p85, %p86
      %p88 = scmp.ne.s32.totalorder %s76, %s77
      %p89 = scmp.eq.s32.totalorder %s20, 1
      %p90 = por %p88, %p89
      %p92 = scmp.ne.s32.totalorder %s77, %s91
      %p93 = scmp.eq.s32.totalorder %s20, 0
      %p94 = por %p92, %p93
      %s95 = ssub.s32 %s14, %s21
      %p96 = scmp.eq.s32.totalorder %s95, 0
      %s98 = sadd.s32 %s97, 1
      %s99 = scalar_select %p96, %s97, %s98
      %p102 = pneg %p96
      %p103 = scmp.eq.s32.totalorder %s14, 1
      %p104 = por %p102, %p103
      %p105 = scmp.ne.s32.totalorder %s97, %s100
      %p106 = scmp.eq.s32.totalorder %s14, 0
      %p107 = por %p105, %p106
      %p108 = scmp.ne.s32.totalorder %s97, %s100
      %p109 = scmp.eq.s32.totalorder %s19, 1
      %p110 = por %p108, %p109
      %p111 = scmp.ne.s32.totalorder %s100, %s101
      %p112 = scmp.eq.s32.totalorder %s19, 0
      %p113 = por %p111, %p112
      %p114 = scmp.ne.s32.totalorder %s100, %s101
      %p115 = scmp.eq.s32.totalorder %s20, 1
      %p116 = por %p114, %p115
      %p118 = scmp.ne.s32.totalorder %s101, %s117
      %p119 = scmp.eq.s32.totalorder %s20, 0
      %p120 = por %p118, %p119
      %s121 = ssub.s32 %s14, %s21
      %p122 = scmp.eq.s32.totalorder %s121, 0
      %s124 = sadd.s32 %s123, 1
      %s125 = scalar_select %p122, %s123, %s124
      %p128 = pneg %p122
      %p129 = scmp.eq.s32.totalorder %s14, 1
      %p130 = por %p128, %p129
      %p131 = scmp.ne.s32.totalorder %s123, %s126
      %p132 = scmp.eq.s32.totalorder %s14, 0
      %p133 = por %p131, %p132
      %p134 = scmp.ne.s32.totalorder %s123, %s126
      %p135 = scmp.eq.s32.totalorder %s19, 1
      %p136 = por %p134, %p135
      %p137 = scmp.ne.s32.totalorder %s126, %s127
      %p138 = scmp.eq.s32.totalorder %s19, 0
      %p139 = por %p137, %p138
      %p140 = scmp.ne.s32.totalorder %s126, %s127
      %p141 = scmp.eq.s32.totalorder %s20, 1
      %p142 = por %p140, %p141
      %p144 = scmp.ne.s32.totalorder %s127, %s143
      %p145 = scmp.eq.s32.totalorder %s20, 0
      %p146 = por %p144, %p145
      %p147 = scmp.le.s32.totalorder 1, %s14
      %p148 = scmp.lt.s32.totalorder %s14, 3
      %p149 = pnand %p147, %p148
      %p150 = pneg %p149
      // Predicated region
      $region9: #{tpu_custom_call.1} parent=5 // pred_check
        _
      $region10: #{tpu_custom_call.1} parent=5 // pred_check_branch
        %152 = sbr.rel (%p149) target = $region12
      $region11: #{tpu_custom_call.1} parent=5 // pred_region
        %s153 = ssub.s32 %s14, 1
        // Predicated region
        $region13: #{tpu_custom_call.1} parent=11 // pred_check
          %p154 = pneg %p87
        $region14: #{tpu_custom_call.1} parent=11 // pred_check_branch
          %156 = sbr.rel (%p154) target = $region16
        $region15: #{tpu_custom_call.1} parent=11 // pred_region
          _
        $region16: #{tpu_custom_call.1} parent=11 // pred_fallthru
          _
      $region12: #{tpu_custom_call.1} parent=5 // pred_fallthru
        _
      %p157 = scmp.lt.s32.totalorder %s14, 2
      // Predicated region
      $region17: #{tpu_custom_call.1} parent=5 // pred_check
        %p158 = pneg %p157
      $region18: #{tpu_custom_call.1} parent=5 // pred_check_branch
        %160 = sbr.rel (%p158) target = $region20
      $region19: #{tpu_custom_call.1} parent=5 // pred_region
        // Predicated region
        $region21: #{tpu_custom_call.1} parent=19 // pred_check
          %p161 = pneg %p34
        $region22: #{tpu_custom_call.1} parent=19 // pred_check_branch
          %163 = sbr.rel (%p161) target = $region24
        $region23: #{tpu_custom_call.1} parent=19 // pred_region
          %s164 = smul.u32 16, %s14
          %p165 = scmp.lt.s32.totalorder %s164, 31
          %s166 = scalar_select %p165, %s164, 31
          %s167 = smul.addr %s166, 4
          %s168 = scalar_lea.vmem %s0, %s167
          %s169 = smul.u32 16, %s14
        $region24: #{tpu_custom_call.1} parent=19 // pred_fallthru
          _
        // Predicated region
        $region25: #{tpu_custom_call.1} parent=19 // pred_check
          %p170 = pneg %p60
        $region26: #{tpu_custom_call.1} parent=19 // pred_check_branch
          %172 = sbr.rel (%p170) target = $region28
        $region27: #{tpu_custom_call.1} parent=19 // pred_region
          %s173 = smul.u32 16, %s14
          %p174 = scmp.lt.s32.totalorder %s173, 31
          %s175 = scalar_select %p174, %s173, 31
          %s176 = smul.addr %s175, 8
          %s177 = scalar_lea.vmem %s1, %s176
          %s178 = smul.u32 16, %s14
        $region28: #{tpu_custom_call.1} parent=19 // pred_fallthru
          _
      $region20: #{tpu_custom_call.1} parent=5 // pred_fallthru
        _
      %p179 = scmp.le.s32.totalorder 1, %s14
      %p180 = scmp.lt.s32.totalorder %s14, 3
      %p181 = pnand %p179, %p180
      %p182 = pneg %p181
      // Predicated region
      $region29: #{tpu_custom_call.1} parent=5 // pred_check
        _
      $region30: #{tpu_custom_call.1} parent=5 // pred_check_branch
        %184 = sbr.rel (%p181) target = $region32
      $region31: #{tpu_custom_call.1} parent=5 // pred_region
        %s185 = ssub.s32 %s14, 1
        %s186 = smul.u32 16, %s19
        %p187 = scmp.lt.s32.totalorder %s186, 31
        %s188 = scalar_select %p187, %s186, 31
        %s189 = smul.addr %s188, 4
        %s190 = scalar_lea.vmem %s0, %s189
        %p191 = pneg %p40
        %p192 = pneg %p37
        %s193 = smul.u32 16, %s19
        %p194 = scmp.lt.s32.totalorder %s193, 31
        %s195 = scalar_select %p194, %s193, 31
        %s196 = smul.addr %s195, 8
        %s197 = scalar_lea.vmem %s1, %s196
        %p198 = pneg %p66
        %p199 = pneg %p63
        %p200 = pneg %p87
        %p201 = pneg %p84
        %p202 = pneg %p113
        %p203 = pneg %p110
        %s204 = smul.u32 16, %s19
        %p205 = scmp.lt.s32.totalorder %s204, 31
        %s206 = scalar_select %p205, %s204, 31
        %s207 = smul.addr %s206, 4
        %s208 = scalar_lea.vmem %s3, %s207
        %p209 = pneg %p139
        %p210 = pneg %p136
        %s211 = sand.u32 %s126, 1
        %s212 = scalar_lea.sflag [#allocation3], %s211
        %s213 = sand.u32 %s126, 1
        %s214 = smul.addr %s213, 2
        %s215 = scalar_lea.vmem [#allocation2], %s214
        %s216 = smul.u32 16, %s19
        %p217 = scmp.lt.s32.totalorder %s216, 31
        %s218 = scalar_select %p217, %s216, 31
        %s219 = smul.addr %s218, 4
        %s220 = scalar_lea.vmem %s0, %s219
        %s221 = smul.u32 16, %s19
        %s222 = smul.u32 16, %s19
        %p223 = scmp.lt.s32.totalorder %s222, 31
        %s224 = scalar_select %p223, %s222, 31
        %s225 = smul.addr %s224, 8
        %s226 = scalar_lea.vmem %s1, %s225
        %s227 = smul.u32 16, %s19
        %s228 = smul.u32 16, %s19
        %p229 = scmp.lt.s32.totalorder %s228, 31
        %s230 = scalar_select %p229, %s228, 31
        %s231 = smul.addr %s230, 4
        %s232 = scalar_lea.vmem %s3, %s231
        %s233 = smul.u32 16, %s19
        %v235 = vld [vmem:[%s220] sm:$0xf]
        %v236 = vld [vmem:[%s220 + $0x4] sm:$0xf]
        %v237 = vld [vmem:[%s220 + $0x8] sm:$0xf]
        %v238 = vld [vmem:[%s220 + $0xc] sm:$0xf]
        %v239 = vld [vmem:[%s220 + $0x10] sm:$0xf]
        %v240 = vld [vmem:[%s220 + $0x14] sm:$0xf]
        %v241 = vld [vmem:[%s220 + $0x18] sm:$0xf]
        %v242 = vld [vmem:[%s220 + $0x1c] sm:$0xf]
        %v243 = vld [vmem:[%s220 + $0x20] sm:$0xf]
        %v244 = vld [vmem:[%s220 + $0x24] sm:$0xf]
        %v245 = vld [vmem:[%s220 + $0x28] sm:$0xf]
        %v246 = vld [vmem:[%s220 + $0x2c] sm:$0xf]
        %v247 = vld [vmem:[%s220 + $0x30] sm:$0xf]
        %v248 = vld [vmem:[%s220 + $0x34] sm:$0xf]
        %v249 = vld [vmem:[%s220 + $0x38] sm:$0xf]
        %v250 = vld [vmem:[%s220 + $0x3c] sm:$0xf]
        %v251 = vld [vmem:[%s2] sm:$0xf]
        %v252 = vld [vmem:[%s2 + $0x4] sm:$0xf]
        %v253 = vld [vmem:[%s2 + $0x8] sm:$0xf]
        %v254 = vld [vmem:[%s2 + $0xc] sm:$0xf]
        %v255 = vld [vmem:[%s2 + $0x10] sm:$0xf]
        %v256 = vld [vmem:[%s2 + $0x14] sm:$0xf]
        %v257 = vld [vmem:[%s2 + $0x18] sm:$0xf]
        %v258 = vld [vmem:[%s2 + $0x1c] sm:$0xf]
        %v259 = vld [vmem:[%s2 + $0x20] sm:$0xf]
        %v260 = vld [vmem:[%s2 + $0x24] sm:$0xf]
        %v261 = vld [vmem:[%s2 + $0x28] sm:$0xf]
        %v262 = vld [vmem:[%s2 + $0x2c] sm:$0xf]
        %v263 = vld [vmem:[%s2 + $0x30] sm:$0xf]
        %v264 = vld [vmem:[%s2 + $0x34] sm:$0xf]
        %v265 = vld [vmem:[%s2 + $0x38] sm:$0xf]
        %v266 = vld [vmem:[%s2 + $0x3c] sm:$0xf]
        %v283 = vunpack.c.l.b16 %v235
        %v284 = vunpack.c.l.b16 %v236
        %v285 = vunpack.c.l.b16 %v237
        %v286 = vunpack.c.l.b16 %v238
        %v287 = vunpack.c.l.b16 %v239
        %v288 = vunpack.c.l.b16 %v240
        %v289 = vunpack.c.l.b16 %v241
        %v290 = vunpack.c.l.b16 %v242
        %v291 = vunpack.c.l.b16 %v243
        %v292 = vunpack.c.l.b16 %v244
        %v293 = vunpack.c.l.b16 %v245
        %v294 = vunpack.c.l.b16 %v246
        %v295 = vunpack.c.l.b16 %v247
        %v296 = vunpack.c.l.b16 %v248
        %v297 = vunpack.c.l.b16 %v249
        %v298 = vunpack.c.l.b16 %v250
        %v299 = vpack.c.b16 %v284, %v283
        %v300 = vpack.c.b16 %v286, %v285
        %v301 = vpack.c.b16 %v288, %v287
        %v302 = vpack.c.b16 %v290, %v289
        %v303 = vpack.c.b16 %v292, %v291
        %v304 = vpack.c.b16 %v294, %v293
        %v305 = vpack.c.b16 %v296, %v295
        %v306 = vpack.c.b16 %v298, %v297
        %v331 = vunpack.c.l.b16 %v251
        %v332 = vunpack.c.l.b16 %v252
        %v333 = vunpack.c.l.b16 %v253
        %v334 = vunpack.c.l.b16 %v254
        %v335 = vunpack.c.l.b16 %v255
        %v336 = vunpack.c.l.b16 %v256
        %v337 = vunpack.c.l.b16 %v257
        %v338 = vunpack.c.l.b16 %v258
        %v339 = vunpack.c.l.b16 %v259
        %v340 = vunpack.c.l.b16 %v260
        %v341 = vunpack.c.l.b16 %v261
        %v342 = vunpack.c.l.b16 %v262
        %v343 = vunpack.c.l.b16 %v263
        %v344 = vunpack.c.l.b16 %v264
        %v345 = vunpack.c.l.b16 %v265
        %v346 = vunpack.c.l.b16 %v266
        %v347 = vpack.c.b16 %v332, %v331
        %v348 = vpack.c.b16 %v334, %v333
        %v349 = vpack.c.b16 %v336, %v335
        %v350 = vpack.c.b16 %v338, %v337
        %v351 = vpack.c.b16 %v340, %v339
        %v352 = vpack.c.b16 %v342, %v341
        %v353 = vpack.c.b16 %v344, %v343
        %v354 = vpack.c.b16 %v346, %v345
        %363 = vmatprep.subr.bf16.mxu0 0
        %364 = vmatpush1.bf16.msra.mxu0 %v347
        %365 = vmatprep.subr.bf16.mxu0 0
        %366 = vmatpush1.bf16.msra.mxu0 %v348
        %367 = vmatprep.subr.bf16.mxu0 0
        %368 = vmatpush1.bf16.msra.mxu0 %v349
        %369 = vmatprep.subr.bf16.mxu0 0
        %370 = vmatpush1.bf16.msra.mxu0 %v350
        %371 = vmatprep.subr.bf16.mxu0 0
        %372 = vmatpush1.bf16.msra.mxu0 %v351
        %373 = vmatprep.subr.bf16.mxu0 0
        %374 = vmatpush1.bf16.msra.mxu0 %v352
        %375 = vmatprep.subr.bf16.mxu0 0
        %376 = vmatpush1.bf16.msra.mxu0 %v353
        %377 = vmatprep.subr.bf16.mxu0 0
        %378 = vmatpush1.bf16.msra.mxu0 %v354
        %379 = vmatprep.subr.bf16.mxu0 0
        %380 = vmatpush1.bf16.msra.mxu0 0
        %381 = vmatprep.subr.bf16.mxu0 0
        %382 = vmatpush1.bf16.msra.mxu0 0
        %383 = vmatprep.subr.bf16.mxu0 0
        %384 = vmatpush1.bf16.msra.mxu0 0
        %385 = vmatprep.subr.bf16.mxu0 0
        %386 = vmatpush1.bf16.msra.mxu0 0
        %387 = vmatprep.subr.bf16.mxu0 0
        %388 = vmatpush1.bf16.msra.mxu0 0
        %389 = vmatprep.subr.bf16.mxu0 0
        %390 = vmatpush1.bf16.msra.mxu0 0
        %391 = vmatprep.subr.bf16.mxu0 0
        %392 = vmatpush1.bf16.msra.mxu0 0
        %393 = vmatprep.subr.bf16.mxu0 0
        %394 = vmatpush1.bf16.msra.mxu0 0
        %395 = vmatprep.mubr.bf16.mxu0 0
        %396 = vmatmul.mubr.bf16.gmra.mrb[0].mxu0 %v299
        %v397 = vpop.f32.mrb[0].mxu0
        %v398 = vadd.f32 0.0, %v397
        %v399 = vpop.f32.mrb[0].mxu0
        %v400 = vpop.f32.mrb[0].mxu0
        %v401 = vadd.f32 0.0, %v400
        %v402 = vpop.f32.mrb[0].mxu0
        %403 = vmatprep.mubr.bf16.mxu0 0
        %404 = vmatmul.mubr.bf16.gmra.mrb[0].mxu0 %v300
        %v405 = vpop.f32.mrb[0].mxu0
        %v406 = vadd.f32 0.0, %v405
        %v407 = vpop.f32.mrb[0].mxu0
        %v408 = vpop.f32.mrb[0].mxu0
        %v409 = vadd.f32 0.0, %v408
        %v410 = vpop.f32.mrb[0].mxu0
        %411 = vmatprep.mubr.bf16.mxu0 0
        %412 = vmatmul.mubr.bf16.gmra.mrb[0].mxu0 %v301
        %v413 = vpop.f32.mrb[0].mxu0
        %v414 = vadd.f32 0.0, %v413
        %v415 = vpop.f32.mrb[0].mxu0
        %v416 = vpop.f32.mrb[0].mxu0
        %v417 = vadd.f32 0.0, %v416
        %v418 = vpop.f32.mrb[0].mxu0
        %419 = vmatprep.mubr.bf16.mxu0 0
        %420 = vmatmul.mubr.bf16.gmra.mrb[0].mxu0 %v302
        %v421 = vpop.f32.mrb[0].mxu0
        %v422 = vadd.f32 0.0, %v421
        %v423 = vpop.f32.mrb[0].mxu0
        %v424 = vpop.f32.mrb[0].mxu0
        %v425 = vadd.f32 0.0, %v424
        %v426 = vpop.f32.mrb[0].mxu0
        %427 = vmatprep.mubr.bf16.mxu0 0
        %428 = vmatmul.mubr.bf16.gmra.mrb[0].mxu0 %v303
        %v429 = vpop.f32.mrb[0].mxu0
        %v430 = vadd.f32 0.0, %v429
        %v431 = vpop.f32.mrb[0].mxu0
        %v432 = vpop.f32.mrb[0].mxu0
        %v433 = vadd.f32 0.0, %v432
        %v434 = vpop.f32.mrb[0].mxu0
        %435 = vmatprep.mubr.bf16.mxu0 0
        %436 = vmatmul.mubr.bf16.gmra.mrb[0].mxu0 %v304
        %v437 = vpop.f32.mrb[0].mxu0
        %v438 = vadd.f32 0.0, %v437
        %v439 = vpop.f32.mrb[0].mxu0
        %v440 = vpop.f32.mrb[0].mxu0
        %v441 = vadd.f32 0.0, %v440
        %v442 = vpop.f32.mrb[0].mxu0
        %443 = vmatprep.mubr.bf16.mxu0 0
        %444 = vmatmul.mubr.bf16.gmra.mrb[0].mxu0 %v305
        %v445 = vpop.f32.mrb[0].mxu0
        %v446 = vadd.f32 0.0, %v445
        %v447 = vpop.f32.mrb[0].mxu0
        %v448 = vpop.f32.mrb[0].mxu0
        %v449 = vadd.f32 0.0, %v448
        %v450 = vpop.f32.mrb[0].mxu0
        %451 = vmatprep.mubr.bf16.mxu0 0
        %452 = vmatmul.mubr.bf16.gmra.mrb[0].mxu0 %v306
        %v453 = vpop.f32.mrb[0].mxu0
        %v454 = vadd.f32 0.0, %v453
        %v455 = vpop.f32.mrb[0].mxu0
        %v456 = vpop.f32.mrb[0].mxu0
        %v457 = vadd.f32 0.0, %v456
        %v458 = vpop.f32.mrb[0].mxu0
        %459 = vdwg.mxu0
        %v460 = vld [vmem:[%s226] sm:$0xff]
        %v461 = vld [vmem:[%s226 + $0x8] sm:$0xff]
        %v462 = vld [vmem:[%s226 + $0x10] sm:$0xff]
        %v463 = vld [vmem:[%s226 + $0x18] sm:$0xff]
        %v464 = vld [vmem:[%s226 + $0x20] sm:$0xff]
        %v465 = vld [vmem:[%s226 + $0x28] sm:$0xff]
        %v466 = vld [vmem:[%s226 + $0x30] sm:$0xff]
        %v467 = vld [vmem:[%s226 + $0x38] sm:$0xff]
        %v468 = vld [vmem:[%s226 + $0x40] sm:$0xff]
        %v469 = vld [vmem:[%s226 + $0x48] sm:$0xff]
        %v470 = vld [vmem:[%s226 + $0x50] sm:$0xff]
        %v471 = vld [vmem:[%s226 + $0x58] sm:$0xff]
        %v472 = vld [vmem:[%s226 + $0x60] sm:$0xff]
        %v473 = vld [vmem:[%s226 + $0x68] sm:$0xff]
        %v474 = vld [vmem:[%s226 + $0x70] sm:$0xff]
        %v475 = vld [vmem:[%s226 + $0x78] sm:$0xff]
        %477 = vset.pattern.permute.xlu0 0
        %478 = vperm.xlu0 %477, %v460
        %v479 = vpop.permute.xlu0 %478
        %482 = vset.pattern.permute.xlu0 0
        %483 = vperm.xlu0 %482, %v461
        %v484 = vpop.permute.xlu0 %483
        %487 = vset.pattern.permute.xlu0 0
        %488 = vperm.xlu0 %487, %v462
        %v489 = vpop.permute.xlu0 %488
        %492 = vset.pattern.permute.xlu0 0
        %493 = vperm.xlu0 %492, %v463
        %v494 = vpop.permute.xlu0 %493
        %497 = vset.pattern.permute.xlu0 0
        %498 = vperm.xlu0 %497, %v464
        %v499 = vpop.permute.xlu0 %498
        %502 = vset.pattern.permute.xlu0 0
        %503 = vperm.xlu0 %502, %v465
        %v504 = vpop.permute.xlu0 %503
        %507 = vset.pattern.permute.xlu0 0
        %508 = vperm.xlu0 %507, %v466
        %v509 = vpop.permute.xlu0 %508
        %512 = vset.pattern.permute.xlu0 0
        %513 = vperm.xlu0 %512, %v467
        %v514 = vpop.permute.xlu0 %513
        %517 = vset.pattern.permute.xlu0 0
        %518 = vperm.xlu0 %517, %v468
        %v519 = vpop.permute.xlu0 %518
        %522 = vset.pattern.permute.xlu0 0
        %523 = vperm.xlu0 %522, %v469
        %v524 = vpop.permute.xlu0 %523
        %527 = vset.pattern.permute.xlu0 0
        %528 = vperm.xlu0 %527, %v470
        %v529 = vpop.permute.xlu0 %528
        %532 = vset.pattern.permute.xlu0 0
        %533 = vperm.xlu0 %532, %v471
        %v534 = vpop.permute.xlu0 %533
        %537 = vset.pattern.permute.xlu0 0
        %538 = vperm.xlu0 %537, %v472
        %v539 = vpop.permute.xlu0 %538
        %542 = vset.pattern.permute.xlu0 0
        %543 = vperm.xlu0 %542, %v473
        %v544 = vpop.permute.xlu0 %543
        %547 = vset.pattern.permute.xlu0 0
        %548 = vperm.xlu0 %547, %v474
        %v549 = vpop.permute.xlu0 %548
        %552 = vset.pattern.permute.xlu0 0
        %553 = vperm.xlu0 %552, %v475
        %v554 = vpop.permute.xlu0 %553
        %v556 = vmul.f32 %v479, %v398
        %v557 = vmul.f32 %v484, %v401
        %v558 = vmul.f32 %v489, %v406
        %v559 = vmul.f32 %v494, %v409
        %v560 = vmul.f32 %v499, %v414
        %v561 = vmul.f32 %v504, %v417
        %v562 = vmul.f32 %v509, %v422
        %v563 = vmul.f32 %v514, %v425
        %v564 = vmul.f32 %v519, %v430
        %v565 = vmul.f32 %v524, %v433
        %v566 = vmul.f32 %v529, %v438
        %v567 = vmul.f32 %v534, %v441
        %v568 = vmul.f32 %v539, %v446
        %v569 = vmul.f32 %v544, %v449
        %v570 = vmul.f32 %v549, %v454
        %v571 = vmul.f32 %v554, %v457
        %588 = vrot.lane.b32.xlu0 %v556, 112
        %v589 = vpop.permute.xlu0 %588
        %590 = vrot.lane.b32.xlu0 %v557, 112
        %v591 = vpop.permute.xlu0 %590
        %592 = vrot.lane.b32.xlu0 %v558, 112
        %v593 = vpop.permute.xlu0 %592
        %594 = vrot.lane.b32.xlu0 %v559, 112
        %v595 = vpop.permute.xlu0 %594
        %596 = vrot.lane.b32.xlu0 %v560, 112
        %v597 = vpop.permute.xlu0 %596
        %598 = vrot.lane.b32.xlu0 %v561, 112
        %v599 = vpop.permute.xlu0 %598
        %600 = vrot.lane.b32.xlu0 %v562, 112
        %v601 = vpop.permute.xlu0 %600
        %602 = vrot.lane.b32.xlu0 %v563, 112
        %v603 = vpop.permute.xlu0 %602
        %604 = vrot.lane.b32.xlu0 %v564, 112
        %v605 = vpop.permute.xlu0 %604
        %606 = vrot.lane.b32.xlu0 %v565, 112
        %v607 = vpop.permute.xlu0 %606
        %608 = vrot.lane.b32.xlu0 %v566, 112
        %v609 = vpop.permute.xlu0 %608
        %610 = vrot.lane.b32.xlu0 %v567, 112
        %v611 = vpop.permute.xlu0 %610
        %612 = vrot.lane.b32.xlu0 %v568, 112
        %v613 = vpop.permute.xlu0 %612
        %614 = vrot.lane.b32.xlu0 %v569, 112
        %v615 = vpop.permute.xlu0 %614
        %616 = vrot.lane.b32.xlu0 %v570, 112
        %v617 = vpop.permute.xlu0 %616
        %618 = vrot.lane.b32.xlu0 %v571, 112
        %v619 = vpop.permute.xlu0 %618
        %v636 = vadd.f32 %v398, %v589
        %v637 = vadd.f32 %v401, %v591
        %v638 = vadd.f32 %v406, %v593
        %v639 = vadd.f32 %v409, %v595
        %v640 = vadd.f32 %v414, %v597
        %v641 = vadd.f32 %v417, %v599
        %v642 = vadd.f32 %v422, %v601
        %v643 = vadd.f32 %v425, %v603
        %v644 = vadd.f32 %v430, %v605
        %v645 = vadd.f32 %v433, %v607
        %v646 = vadd.f32 %v438, %v609
        %v647 = vadd.f32 %v441, %v611
        %v648 = vadd.f32 %v446, %v613
        %v649 = vadd.f32 %v449, %v615
        %v650 = vadd.f32 %v454, %v617
        %v651 = vadd.f32 %v457, %v619
        %652 = vset.pattern.permute.xlu0 1
        %653 = vperm.xlu0 %652, %v460
        %v654 = vpop.permute.xlu0 %653
        %656 = vset.pattern.permute.xlu0 1
        %657 = vperm.xlu0 %656, %v461
        %v658 = vpop.permute.xlu0 %657
        %660 = vset.pattern.permute.xlu0 1
        %661 = vperm.xlu0 %660, %v462
        %v662 = vpop.permute.xlu0 %661
        %664 = vset.pattern.permute.xlu0 1
        %665 = vperm.xlu0 %664, %v463
        %v666 = vpop.permute.xlu0 %665
        %668 = vset.pattern.permute.xlu0 1
        %669 = vperm.xlu0 %668, %v464
        %v670 = vpop.permute.xlu0 %669
        %672 = vset.pattern.permute.xlu0 1
        %673 = vperm.xlu0 %672, %v465
        %v674 = vpop.permute.xlu0 %673
        %676 = vset.pattern.permute.xlu0 1
        %677 = vperm.xlu0 %676, %v466
        %v678 = vpop.permute.xlu0 %677
        %680 = vset.pattern.permute.xlu0 1
        %681 = vperm.xlu0 %680, %v467
        %v682 = vpop.permute.xlu0 %681
        %684 = vset.pattern.permute.xlu0 1
        %685 = vperm.xlu0 %684, %v468
        %v686 = vpop.permute.xlu0 %685
        %688 = vset.pattern.permute.xlu0 1
        %689 = vperm.xlu0 %688, %v469
        %v690 = vpop.permute.xlu0 %689
        %692 = vset.pattern.permute.xlu0 1
        %693 = vperm.xlu0 %692, %v470
        %v694 = vpop.permute.xlu0 %693
        %696 = vset.pattern.permute.xlu0 1
        %697 = vperm.xlu0 %696, %v471
        %v698 = vpop.permute.xlu0 %697
        %700 = vset.pattern.permute.xlu0 1
        %701 = vperm.xlu0 %700, %v472
        %v702 = vpop.permute.xlu0 %701
        %704 = vset.pattern.permute.xlu0 1
        %705 = vperm.xlu0 %704, %v473
        %v706 = vpop.permute.xlu0 %705
        %708 = vset.pattern.permute.xlu0 1
        %709 = vperm.xlu0 %708, %v474
        %v710 = vpop.permute.xlu0 %709
        %712 = vset.pattern.permute.xlu0 1
        %713 = vperm.xlu0 %712, %v475
        %v714 = vpop.permute.xlu0 %713
        %v716 = vmul.f32 %v654, %v398
        %v717 = vmul.f32 %v658, %v401
        %v718 = vmul.f32 %v662, %v406
        %v719 = vmul.f32 %v666, %v409
        %v720 = vmul.f32 %v670, %v414
        %v721 = vmul.f32 %v674, %v417
        %v722 = vmul.f32 %v678, %v422
        %v723 = vmul.f32 %v682, %v425
        %v724 = vmul.f32 %v686, %v430
        %v725 = vmul.f32 %v690, %v433
        %v726 = vmul.f32 %v694, %v438
        %v727 = vmul.f32 %v698, %v441
        %v728 = vmul.f32 %v702, %v446
        %v729 = vmul.f32 %v706, %v449
        %v730 = vmul.f32 %v710, %v454
        %v731 = vmul.f32 %v714, %v457
        %748 = vrot.lane.b32.xlu0 %v716, 96
        %v749 = vpop.permute.xlu0 %748
        %750 = vrot.lane.b32.xlu0 %v717, 96
        %v751 = vpop.permute.xlu0 %750
        %752 = vrot.lane.b32.xlu0 %v718, 96
        %v753 = vpop.permute.xlu0 %752
        %754 = vrot.lane.b32.xlu0 %v719, 96
        %v755 = vpop.permute.xlu0 %754
        %756 = vrot.lane.b32.xlu0 %v720, 96
        %v757 = vpop.permute.xlu0 %756
        %758 = vrot.lane.b32.xlu0 %v721, 96
        %v759 = vpop.permute.xlu0 %758
        %760 = vrot.lane.b32.xlu0 %v722, 96
        %v761 = vpop.permute.xlu0 %760
        %762 = vrot.lane.b32.xlu0 %v723, 96
        %v763 = vpop.permute.xlu0 %762
        %764 = vrot.lane.b32.xlu0 %v724, 96
        %v765 = vpop.permute.xlu0 %764
        %766 = vrot.lane.b32.xlu0 %v725, 96
        %v767 = vpop.permute.xlu0 %766
        %768 = vrot.lane.b32.xlu0 %v726, 96
        %v769 = vpop.permute.xlu0 %768
        %770 = vrot.lane.b32.xlu0 %v727, 96
        %v771 = vpop.permute.xlu0 %770
        %772 = vrot.lane.b32.xlu0 %v728, 96
        %v773 = vpop.permute.xlu0 %772
        %774 = vrot.lane.b32.xlu0 %v729, 96
        %v775 = vpop.permute.xlu0 %774
        %776 = vrot.lane.b32.xlu0 %v730, 96
        %v777 = vpop.permute.xlu0 %776
        %778 = vrot.lane.b32.xlu0 %v731, 96
        %v779 = vpop.permute.xlu0 %778
        %v796 = vadd.f32 %v636, %v749
        %v797 = vadd.f32 %v637, %v751
        %v798 = vadd.f32 %v638, %v753
        %v799 = vadd.f32 %v639, %v755
        %v800 = vadd.f32 %v640, %v757
        %v801 = vadd.f32 %v641, %v759
        %v802 = vadd.f32 %v642, %v761
        %v803 = vadd.f32 %v643, %v763
        %v804 = vadd.f32 %v644, %v765
        %v805 = vadd.f32 %v645, %v767
        %v806 = vadd.f32 %v646, %v769
        %v807 = vadd.f32 %v647, %v771
        %v808 = vadd.f32 %v648, %v773
        %v809 = vadd.f32 %v649, %v775
        %v810 = vadd.f32 %v650, %v777
        %v811 = vadd.f32 %v651, %v779
        %812 = vset.pattern.permute.xlu0 2
        %813 = vperm.xlu0 %812, %v460
        %v814 = vpop.permute.xlu0 %813
        %816 = vset.pattern.permute.xlu0 2
        %817 = vperm.xlu0 %816, %v461
        %v818 = vpop.permute.xlu0 %817
        %820 = vset.pattern.permute.xlu0 2
        %821 = vperm.xlu0 %820, %v462
        %v822 = vpop.permute.xlu0 %821
        %824 = vset.pattern.permute.xlu0 2
        %825 = vperm.xlu0 %824, %v463
        %v826 = vpop.permute.xlu0 %825
        %828 = vset.pattern.permute.xlu0 2
        %829 = vperm.xlu0 %828, %v464
        %v830 = vpop.permute.xlu0 %829
        %832 = vset.pattern.permute.xlu0 2
        %833 = vperm.xlu0 %832, %v465
        %v834 = vpop.permute.xlu0 %833
        %836 = vset.pattern.permute.xlu0 2
        %837 = vperm.xlu0 %836, %v466
        %v838 = vpop.permute.xlu0 %837
        %840 = vset.pattern.permute.xlu0 2
        %841 = vperm.xlu0 %840, %v467
        %v842 = vpop.permute.xlu0 %841
        %844 = vset.pattern.permute.xlu0 2
        %845 = vperm.xlu0 %844, %v468
        %v846 = vpop.permute.xlu0 %845
        %848 = vset.pattern.permute.xlu0 2
        %849 = vperm.xlu0 %848, %v469
        %v850 = vpop.permute.xlu0 %849
        %852 = vset.pattern.permute.xlu0 2
        %853 = vperm.xlu0 %852, %v470
        %v854 = vpop.permute.xlu0 %853
        %856 = vset.pattern.permute.xlu0 2
        %857 = vperm.xlu0 %856, %v471
        %v858 = vpop.permute.xlu0 %857
        %860 = vset.pattern.permute.xlu0 2
        %861 = vperm.xlu0 %860, %v472
        %v862 = vpop.permute.xlu0 %861
        %864 = vset.pattern.permute.xlu0 2
        %865 = vperm.xlu0 %864, %v473
        %v866 = vpop.permute.xlu0 %865
        %868 = vset.pattern.permute.xlu0 2
        %869 = vperm.xlu0 %868, %v474
        %v870 = vpop.permute.xlu0 %869
        %872 = vset.pattern.permute.xlu0 2
        %873 = vperm.xlu0 %872, %v475
        %v874 = vpop.permute.xlu0 %873
        %v876 = vmul.f32 %v814, %v398
        %v877 = vmul.f32 %v818, %v401
        %v878 = vmul.f32 %v822, %v406
        %v879 = vmul.f32 %v826, %v409
        %v880 = vmul.f32 %v830, %v414
        %v881 = vmul.f32 %v834, %v417
        %v882 = vmul.f32 %v838, %v422
        %v883 = vmul.f32 %v842, %v425
        %v884 = vmul.f32 %v846, %v430
        %v885 = vmul.f32 %v850, %v433
        %v886 = vmul.f32 %v854, %v438
        %v887 = vmul.f32 %v858, %v441
        %v888 = vmul.f32 %v862, %v446
        %v889 = vmul.f32 %v866, %v449
        %v890 = vmul.f32 %v870, %v454
        %v891 = vmul.f32 %v874, %v457
        %908 = vrot.lane.b32.xlu0 %v876, 80
        %v909 = vpop.permute.xlu0 %908
        %910 = vrot.lane.b32.xlu0 %v877, 80
        %v911 = vpop.permute.xlu0 %910
        %912 = vrot.lane.b32.xlu0 %v878, 80
        %v913 = vpop.permute.xlu0 %912
        %914 = vrot.lane.b32.xlu0 %v879, 80
        %v915 = vpop.permute.xlu0 %914
        %916 = vrot.lane.b32.xlu0 %v880, 80
        %v917 = vpop.permute.xlu0 %916
        %918 = vrot.lane.b32.xlu0 %v881, 80
        %v919 = vpop.permute.xlu0 %918
        %920 = vrot.lane.b32.xlu0 %v882, 80
        %v921 = vpop.permute.xlu0 %920
        %922 = vrot.lane.b32.xlu0 %v883, 80
        %v923 = vpop.permute.xlu0 %922
        %924 = vrot.lane.b32.xlu0 %v884, 80
        %v925 = vpop.permute.xlu0 %924
        %926 = vrot.lane.b32.xlu0 %v885, 80
        %v927 = vpop.permute.xlu0 %926
        %928 = vrot.lane.b32.xlu0 %v886, 80
        %v929 = vpop.permute.xlu0 %928
        %930 = vrot.lane.b32.xlu0 %v887, 80
        %v931 = vpop.permute.xlu0 %930
        %932 = vrot.lane.b32.xlu0 %v888, 80
        %v933 = vpop.permute.xlu0 %932
        %934 = vrot.lane.b32.xlu0 %v889, 80
        %v935 = vpop.permute.xlu0 %934
        %936 = vrot.lane.b32.xlu0 %v890, 80
        %v937 = vpop.permute.xlu0 %936
        %938 = vrot.lane.b32.xlu0 %v891, 80
        %v939 = vpop.permute.xlu0 %938
        %v956 = vadd.f32 %v796, %v909
        %v957 = vadd.f32 %v797, %v911
        %v958 = vadd.f32 %v798, %v913
        %v959 = vadd.f32 %v799, %v915
        %v960 = vadd.f32 %v800, %v917
        %v961 = vadd.f32 %v801, %v919
        %v962 = vadd.f32 %v802, %v921
        %v963 = vadd.f32 %v803, %v923
        %v964 = vadd.f32 %v804, %v925
        %v965 = vadd.f32 %v805, %v927
        %v966 = vadd.f32 %v806, %v929
        %v967 = vadd.f32 %v807, %v931
        %v968 = vadd.f32 %v808, %v933
        %v969 = vadd.f32 %v809, %v935
        %v970 = vadd.f32 %v810, %v937
        %v971 = vadd.f32 %v811, %v939
        %972 = vset.pattern.permute.xlu0 3
        %973 = vperm.xlu0 %972, %v460
        %v974 = vpop.permute.xlu0 %973
        %976 = vset.pattern.permute.xlu0 3
        %977 = vperm.xlu0 %976, %v461
        %v978 = vpop.permute.xlu0 %977
        %980 = vset.pattern.permute.xlu0 3
        %981 = vperm.xlu0 %980, %v462
        %v982 = vpop.permute.xlu0 %981
        %984 = vset.pattern.permute.xlu0 3
        %985 = vperm.xlu0 %984, %v463
        %v986 = vpop.permute.xlu0 %985
        %988 = vset.pattern.permute.xlu0 3
        %989 = vperm.xlu0 %988, %v464
        %v990 = vpop.permute.xlu0 %989
        %992 = vset.pattern.permute.xlu0 3
        %993 = vperm.xlu0 %992, %v465
        %v994 = vpop.permute.xlu0 %993
        %996 = vset.pattern.permute.xlu0 3
        %997 = vperm.xlu0 %996, %v466
        %v998 = vpop.permute.xlu0 %997
        %1000 = vset.pattern.permute.xlu0 3
        %1001 = vperm.xlu0 %1000, %v467
        %v1002 = vpop.permute.xlu0 %1001
        %1004 = vset.pattern.permute.xlu0 3
        %1005 = vperm.xlu0 %1004, %v468
        %v1006 = vpop.permute.xlu0 %1005
        %1008 = vset.pattern.permute.xlu0 3
        %1009 = vperm.xlu0 %1008, %v469
        %v1010 = vpop.permute.xlu0 %1009
        %1012 = vset.pattern.permute.xlu0 3
        %1013 = vperm.xlu0 %1012, %v470
        %v1014 = vpop.permute.xlu0 %1013
        %1016 = vset.pattern.permute.xlu0 3
        %1017 = vperm.xlu0 %1016, %v471
        %v1018 = vpop.permute.xlu0 %1017
        %1020 = vset.pattern.permute.xlu0 3
        %1021 = vperm.xlu0 %1020, %v472
        %v1022 = vpop.permute.xlu0 %1021
        %1024 = vset.pattern.permute.xlu0 3
        %1025 = vperm.xlu0 %1024, %v473
        %v1026 = vpop.permute.xlu0 %1025
        %1028 = vset.pattern.permute.xlu0 3
        %1029 = vperm.xlu0 %1028, %v474
        %v1030 = vpop.permute.xlu0 %1029
        %1032 = vset.pattern.permute.xlu0 3
        %1033 = vperm.xlu0 %1032, %v475
        %v1034 = vpop.permute.xlu0 %1033
        %v1036 = vmul.f32 %v974, %v398
        %v1037 = vmul.f32 %v978, %v401
        %v1038 = vmul.f32 %v982, %v406
        %v1039 = vmul.f32 %v986, %v409
        %v1040 = vmul.f32 %v990, %v414
        %v1041 = vmul.f32 %v994, %v417
        %v1042 = vmul.f32 %v998, %v422
        %v1043 = vmul.f32 %v1002, %v425
        %v1044 = vmul.f32 %v1006, %v430
        %v1045 = vmul.f32 %v1010, %v433
        %v1046 = vmul.f32 %v1014, %v438
        %v1047 = vmul.f32 %v1018, %v441
        %v1048 = vmul.f32 %v1022, %v446
        %v1049 = vmul.f32 %v1026, %v449
        %v1050 = vmul.f32 %v1030, %v454
        %v1051 = vmul.f32 %v1034, %v457
        %1068 = vrot.lane.b32.xlu0 %v1036, 64
        %v1069 = vpop.permute.xlu0 %1068
        %1070 = vrot.lane.b32.xlu0 %v1037, 64
        %v1071 = vpop.permute.xlu0 %1070
        %1072 = vrot.lane.b32.xlu0 %v1038, 64
        %v1073 = vpop.permute.xlu0 %1072
        %1074 = vrot.lane.b32.xlu0 %v1039, 64
        %v1075 = vpop.permute.xlu0 %1074
        %1076 = vrot.lane.b32.xlu0 %v1040, 64
        %v1077 = vpop.permute.xlu0 %1076
        %1078 = vrot.lane.b32.xlu0 %v1041, 64
        %v1079 = vpop.permute.xlu0 %1078
        %1080 = vrot.lane.b32.xlu0 %v1042, 64
        %v1081 = vpop.permute.xlu0 %1080
        %1082 = vrot.lane.b32.xlu0 %v1043, 64
        %v1083 = vpop.permute.xlu0 %1082
        %1084 = vrot.lane.b32.xlu0 %v1044, 64
        %v1085 = vpop.permute.xlu0 %1084
        %1086 = vrot.lane.b32.xlu0 %v1045, 64
        %v1087 = vpop.permute.xlu0 %1086
        %1088 = vrot.lane.b32.xlu0 %v1046, 64
        %v1089 = vpop.permute.xlu0 %1088
        %1090 = vrot.lane.b32.xlu0 %v1047, 64
        %v1091 = vpop.permute.xlu0 %1090
        %1092 = vrot.lane.b32.xlu0 %v1048, 64
        %v1093 = vpop.permute.xlu0 %1092
        %1094 = vrot.lane.b32.xlu0 %v1049, 64
        %v1095 = vpop.permute.xlu0 %1094
        %1096 = vrot.lane.b32.xlu0 %v1050, 64
        %v1097 = vpop.permute.xlu0 %1096
        %1098 = vrot.lane.b32.xlu0 %v1051, 64
        %v1099 = vpop.permute.xlu0 %1098
        %v1116 = vadd.f32 %v956, %v1069
        %v1117 = vadd.f32 %v957, %v1071
        %v1118 = vadd.f32 %v958, %v1073
        %v1119 = vadd.f32 %v959, %v1075
        %v1120 = vadd.f32 %v960, %v1077
        %v1121 = vadd.f32 %v961, %v1079
        %v1122 = vadd.f32 %v962, %v1081
        %v1123 = vadd.f32 %v963, %v1083
        %v1124 = vadd.f32 %v964, %v1085
        %v1125 = vadd.f32 %v965, %v1087
        %v1126 = vadd.f32 %v966, %v1089
        %v1127 = vadd.f32 %v967, %v1091
        %v1128 = vadd.f32 %v968, %v1093
        %v1129 = vadd.f32 %v969, %v1095
        %v1130 = vadd.f32 %v970, %v1097
        %v1131 = vadd.f32 %v971, %v1099
        %1132 = vset.pattern.permute.xlu0 4
        %1133 = vperm.xlu0 %1132, %v460
        %v1134 = vpop.permute.xlu0 %1133
        %1136 = vset.pattern.permute.xlu0 4
        %1137 = vperm.xlu0 %1136, %v461
        %v1138 = vpop.permute.xlu0 %1137
        %1140 = vset.pattern.permute.xlu0 4
        %1141 = vperm.xlu0 %1140, %v462
        %v1142 = vpop.permute.xlu0 %1141
        %1144 = vset.pattern.permute.xlu0 4
        %1145 = vperm.xlu0 %1144, %v463
        %v1146 = vpop.permute.xlu0 %1145
        %1148 = vset.pattern.permute.xlu0 4
        %1149 = vperm.xlu0 %1148, %v464
        %v1150 = vpop.permute.xlu0 %1149
        %1152 = vset.pattern.permute.xlu0 4
        %1153 = vperm.xlu0 %1152, %v465
        %v1154 = vpop.permute.xlu0 %1153
        %1156 = vset.pattern.permute.xlu0 4
        %1157 = vperm.xlu0 %1156, %v466
        %v1158 = vpop.permute.xlu0 %1157
        %1160 = vset.pattern.permute.xlu0 4
        %1161 = vperm.xlu0 %1160, %v467
        %v1162 = vpop.permute.xlu0 %1161
        %1164 = vset.pattern.permute.xlu0 4
        %1165 = vperm.xlu0 %1164, %v468
        %v1166 = vpop.permute.xlu0 %1165
        %1168 = vset.pattern.permute.xlu0 4
        %1169 = vperm.xlu0 %1168, %v469
        %v1170 = vpop.permute.xlu0 %1169
        %1172 = vset.pattern.permute.xlu0 4
        %1173 = vperm.xlu0 %1172, %v470
        %v1174 = vpop.permute.xlu0 %1173
        %1176 = vset.pattern.permute.xlu0 4
        %1177 = vperm.xlu0 %1176, %v471
        %v1178 = vpop.permute.xlu0 %1177
        %1180 = vset.pattern.permute.xlu0 4
        %1181 = vperm.xlu0 %1180, %v472
        %v1182 = vpop.permute.xlu0 %1181
        %1184 = vset.pattern.permute.xlu0 4
        %1185 = vperm.xlu0 %1184, %v473
        %v1186 = vpop.permute.xlu0 %1185
        %1188 = vset.pattern.permute.xlu0 4
        %1189 = vperm.xlu0 %1188, %v474
        %v1190 = vpop.permute.xlu0 %1189
        %1192 = vset.pattern.permute.xlu0 4
        %1193 = vperm.xlu0 %1192, %v475
        %v1194 = vpop.permute.xlu0 %1193
        %v1196 = vmul.f32 %v1134, %v398
        %v1197 = vmul.f32 %v1138, %v401
        %v1198 = vmul.f32 %v1142, %v406
        %v1199 = vmul.f32 %v1146, %v409
        %v1200 = vmul.f32 %v1150, %v414
        %v1201 = vmul.f32 %v1154, %v417
        %v1202 = vmul.f32 %v1158, %v422
        %v1203 = vmul.f32 %v1162, %v425
        %v1204 = vmul.f32 %v1166, %v430
        %v1205 = vmul.f32 %v1170, %v433
        %v1206 = vmul.f32 %v1174, %v438
        %v1207 = vmul.f32 %v1178, %v441
        %v1208 = vmul.f32 %v1182, %v446
        %v1209 = vmul.f32 %v1186, %v449
        %v1210 = vmul.f32 %v1190, %v454
        %v1211 = vmul.f32 %v1194, %v457
        %1228 = vrot.lane.b32.xlu0 %v1196, 48
        %v1229 = vpop.permute.xlu0 %1228
        %1230 = vrot.lane.b32.xlu0 %v1197, 48
        %v1231 = vpop.permute.xlu0 %1230
        %1232 = vrot.lane.b32.xlu0 %v1198, 48
        %v1233 = vpop.permute.xlu0 %1232
        %1234 = vrot.lane.b32.xlu0 %v1199, 48
        %v1235 = vpop.permute.xlu0 %1234
        %1236 = vrot.lane.b32.xlu0 %v1200, 48
        %v1237 = vpop.permute.xlu0 %1236
        %1238 = vrot.lane.b32.xlu0 %v1201, 48
        %v1239 = vpop.permute.xlu0 %1238
        %1240 = vrot.lane.b32.xlu0 %v1202, 48
        %v1241 = vpop.permute.xlu0 %1240
        %1242 = vrot.lane.b32.xlu0 %v1203, 48
        %v1243 = vpop.permute.xlu0 %1242
        %1244 = vrot.lane.b32.xlu0 %v1204, 48
        %v1245 = vpop.permute.xlu0 %1244
        %1246 = vrot.lane.b32.xlu0 %v1205, 48
        %v1247 = vpop.permute.xlu0 %1246
        %1248 = vrot.lane.b32.xlu0 %v1206, 48
        %v1249 = vpop.permute.xlu0 %1248
        %1250 = vrot.lane.b32.xlu0 %v1207, 48
        %v1251 = vpop.permute.xlu0 %1250
        %1252 = vrot.lane.b32.xlu0 %v1208, 48
        %v1253 = vpop.permute.xlu0 %1252
        %1254 = vrot.lane.b32.xlu0 %v1209, 48
        %v1255 = vpop.permute.xlu0 %1254
        %1256 = vrot.lane.b32.xlu0 %v1210, 48
        %v1257 = vpop.permute.xlu0 %1256
        %1258 = vrot.lane.b32.xlu0 %v1211, 48
        %v1259 = vpop.permute.xlu0 %1258
        %v1276 = vadd.f32 %v1116, %v1229
        %v1277 = vadd.f32 %v1117, %v1231
        %v1278 = vadd.f32 %v1118, %v1233
        %v1279 = vadd.f32 %v1119, %v1235
        %v1280 = vadd.f32 %v1120, %v1237
        %v1281 = vadd.f32 %v1121, %v1239
        %v1282 = vadd.f32 %v1122, %v1241
        %v1283 = vadd.f32 %v1123, %v1243
        %v1284 = vadd.f32 %v1124, %v1245
        %v1285 = vadd.f32 %v1125, %v1247
        %v1286 = vadd.f32 %v1126, %v1249
        %v1287 = vadd.f32 %v1127, %v1251
        %v1288 = vadd.f32 %v1128, %v1253
        %v1289 = vadd.f32 %v1129, %v1255
        %v1290 = vadd.f32 %v1130, %v1257
        %v1291 = vadd.f32 %v1131, %v1259
        %v1292 = vpack.c.bf16 %v1277, %v1276
        %v1293 = vpack.c.bf16 %v1279, %v1278
        %v1294 = vpack.c.bf16 %v1281, %v1280
        %v1295 = vpack.c.bf16 %v1283, %v1282
        %v1296 = vpack.c.bf16 %v1285, %v1284
        %v1297 = vpack.c.bf16 %v1287, %v1286
        %v1298 = vpack.c.bf16 %v1289, %v1288
        %v1299 = vpack.c.bf16 %v1291, %v1290
        %v1308 = vunpack.c.l.b16 %v1292
        %v1309 = vunpack.c.h.b16 %v1292
        %v1310 = vunpack.c.l.b16 %v1293
        %v1311 = vunpack.c.h.b16 %v1293
        %v1312 = vunpack.c.l.b16 %v1294
        %v1313 = vunpack.c.h.b16 %v1294
        %v1314 = vunpack.c.l.b16 %v1295
        %v1315 = vunpack.c.h.b16 %v1295
        %v1316 = vunpack.c.l.b16 %v1296
        %v1317 = vunpack.c.h.b16 %v1296
        %v1318 = vunpack.c.l.b16 %v1297
        %v1319 = vunpack.c.h.b16 %v1297
        %v1320 = vunpack.c.l.b16 %v1298
        %v1321 = vunpack.c.h.b16 %v1298
        %v1322 = vunpack.c.l.b16 %v1299
        %v1323 = vunpack.c.h.b16 %v1299
        %v1324 = vpack.c.b16 %v1308, %v1308
        %v1325 = vpack.c.b16 %v1309, %v1309
        %v1326 = vpack.c.b16 %v1310, %v1310
        %v1327 = vpack.c.b16 %v1311, %v1311
        %v1328 = vpack.c.b16 %v1312, %v1312
        %v1329 = vpack.c.b16 %v1313, %v1313
        %v1330 = vpack.c.b16 %v1314, %v1314
        %v1331 = vpack.c.b16 %v1315, %v1315
        %v1332 = vpack.c.b16 %v1316, %v1316
        %v1333 = vpack.c.b16 %v1317, %v1317
        %v1334 = vpack.c.b16 %v1318, %v1318
        %v1335 = vpack.c.b16 %v1319, %v1319
        %v1336 = vpack.c.b16 %v1320, %v1320
        %v1337 = vpack.c.b16 %v1321, %v1321
        %v1338 = vpack.c.b16 %v1322, %v1322
        %v1339 = vpack.c.b16 %v1323, %v1323
        %vm1356 = vcmask 125952
        %1357 = vst.msk [vmem:[%s232] sm:$0xf] %vm1356, %v1324
        %1358 = vst.msk [vmem:[%s232 + $0x4] sm:$0xf] %vm1356, %v1325
        %1359 = vst.msk [vmem:[%s232 + $0x8] sm:$0xf] %vm1356, %v1326
        %1360 = vst.msk [vmem:[%s232 + $0xc] sm:$0xf] %vm1356, %v1327
        %1361 = vst.msk [vmem:[%s232 + $0x10] sm:$0xf] %vm1356, %v1328
        %1362 = vst.msk [vmem:[%s232 + $0x14] sm:$0xf] %vm1356, %v1329
        %1363 = vst.msk [vmem:[%s232 + $0x18] sm:$0xf] %vm1356, %v1330
        %1364 = vst.msk [vmem:[%s232 + $0x1c] sm:$0xf] %vm1356, %v1331
        %1365 = vst.msk [vmem:[%s232 + $0x20] sm:$0xf] %vm1356, %v1332
        %1366 = vst.msk [vmem:[%s232 + $0x24] sm:$0xf] %vm1356, %v1333
        %1367 = vst.msk [vmem:[%s232 + $0x28] sm:$0xf] %vm1356, %v1334
        %1368 = vst.msk [vmem:[%s232 + $0x2c] sm:$0xf] %vm1356, %v1335
        %1369 = vst.msk [vmem:[%s232 + $0x30] sm:$0xf] %vm1356, %v1336
        %1370 = vst.msk [vmem:[%s232 + $0x34] sm:$0xf] %vm1356, %v1337
        %1371 = vst.msk [vmem:[%s232 + $0x38] sm:$0xf] %vm1356, %v1338
        %1372 = vst.msk [vmem:[%s232 + $0x3c] sm:$0xf] %vm1356, %v1339
        %vm1373 = vcmask 130048
        %v1374 = vsel %vm1373, %v1276, 0.0
        %v1375 = vsel %vm1373, %v1277, 0.0
        %v1376 = vadd.f32 %v1374, %v1375
        %v1377 = vsel %vm1373, %v1278, 0.0
        %v1378 = vadd.f32 %v1376, %v1377
        %v1379 = vsel %vm1373, %v1279, 0.0
        %v1380 = vadd.f32 %v1378, %v1379
        %v1381 = vsel %vm1373, %v1280, 0.0
        %v1382 = vadd.f32 %v1380, %v1381
        %v1383 = vsel %vm1373, %v1281, 0.0
        %v1384 = vadd.f32 %v1382, %v1383
        %v1385 = vsel %vm1373, %v1282, 0.0
        %v1386 = vadd.f32 %v1384, %v1385
        %v1387 = vsel %vm1373, %v1283, 0.0
        %v1388 = vadd.f32 %v1386, %v1387
        %v1389 = vsel %vm1373, %v1284, 0.0
        %v1390 = vadd.f32 %v1388, %v1389
        %v1391 = vsel %vm1373, %v1285, 0.0
        %v1392 = vadd.f32 %v1390, %v1391
        %v1393 = vsel %vm1373, %v1286, 0.0
        %v1394 = vadd.f32 %v1392, %v1393
        %v1395 = vsel %vm1373, %v1287, 0.0
        %v1396 = vadd.f32 %v1394, %v1395
        %v1397 = vsel %vm1373, %v1288, 0.0
        %v1398 = vadd.f32 %v1396, %v1397
        %v1399 = vsel %vm1373, %v1289, 0.0
        %v1400 = vadd.f32 %v1398, %v1399
        %v1401 = vsel %vm1373, %v1290, 0.0
        %v1402 = vadd.f32 %v1400, %v1401
        %v1403 = vsel %vm1373, %v1291, 0.0
        %v1404 = vadd.f32 %v1402, %v1403
        %v1405 = vrot.slane %v1404, 4
        %v1406 = vadd.f32 %v1404, %v1405
        %v1407 = vrot.slane %v1406, 2
        %v1408 = vadd.f32 %v1406, %v1407
        %v1409 = vrot.slane %v1408, 1
        %v1410 = vadd.f32 %v1408, %v1409
        %v1411 = vmul.f32 %v1276, %v1276
        %v1412 = vmul.f32 %v1277, %v1277
        %v1413 = vmul.f32 %v1278, %v1278
        %v1414 = vmul.f32 %v1279, %v1279
        %v1415 = vmul.f32 %v1280, %v1280
        %v1416 = vmul.f32 %v1281, %v1281
        %v1417 = vmul.f32 %v1282, %v1282
        %v1418 = vmul.f32 %v1283, %v1283
        %v1419 = vmul.f32 %v1284, %v1284
        %v1420 = vmul.f32 %v1285, %v1285
        %v1421 = vmul.f32 %v1286, %v1286
        %v1422 = vmul.f32 %v1287, %v1287
        %v1423 = vmul.f32 %v1288, %v1288
        %v1424 = vmul.f32 %v1289, %v1289
        %v1425 = vmul.f32 %v1290, %v1290
        %v1426 = vmul.f32 %v1291, %v1291
        %v1427 = vsel %vm1373, %v1411, 0.0
        %v1428 = vsel %vm1373, %v1412, 0.0
        %v1429 = vadd.f32 %v1427, %v1428
        %v1430 = vsel %vm1373, %v1413, 0.0
        %v1431 = vadd.f32 %v1429, %v1430
        %v1432 = vsel %vm1373, %v1414, 0.0
        %v1433 = vadd.f32 %v1431, %v1432
        %v1434 = vsel %vm1373, %v1415, 0.0
        %v1435 = vadd.f32 %v1433, %v1434
        %v1436 = vsel %vm1373, %v1416, 0.0
        %v1437 = vadd.f32 %v1435, %v1436
        %v1438 = vsel %vm1373, %v1417, 0.0
        %v1439 = vadd.f32 %v1437, %v1438
        %v1440 = vsel %vm1373, %v1418, 0.0
        %v1441 = vadd.f32 %v1439, %v1440
        %v1442 = vsel %vm1373, %v1419, 0.0
        %v1443 = vadd.f32 %v1441, %v1442
        %v1444 = vsel %vm1373, %v1420, 0.0
        %v1445 = vadd.f32 %v1443, %v1444
        %v1446 = vsel %vm1373, %v1421, 0.0
        %v1447 = vadd.f32 %v1445, %v1446
        %v1448 = vsel %vm1373, %v1422, 0.0
        %v1449 = vadd.f32 %v1447, %v1448
        %v1450 = vsel %vm1373, %v1423, 0.0
        %v1451 = vadd.f32 %v1449, %v1450
        %v1452 = vsel %vm1373, %v1424, 0.0
        %v1453 = vadd.f32 %v1451, %v1452
        %v1454 = vsel %vm1373, %v1425, 0.0
        %v1455 = vadd.f32 %v1453, %v1454
        %v1456 = vsel %vm1373, %v1426, 0.0
        %v1457 = vadd.f32 %v1455, %v1456
        %v1458 = vrot.slane %v1457, 4
        %v1459 = vadd.f32 %v1457, %v1458
        %v1460 = vrot.slane %v1459, 2
        %v1461 = vadd.f32 %v1459, %v1460
        %v1462 = vrot.slane %v1461, 1
        %v1463 = vadd.f32 %v1461, %v1462
        %vm1464 = vcmask 1040384
        %v1465 = vsel %vm1464, %v1410, %v1463
        %vm1466 = vcmask 123904
        %1467 = vst.msk [vmem:[%s215] sm:$0x3] %vm1466, %v1465
        %s1468 = smul.u32 16, %s19
        %p1469 = scmp.lt.s32.totalorder %s1468, 31
        %s1470 = scalar_select %p1469, %s1468, 31
        %s1471 = smul.addr %s1470, 4
        %s1472 = scalar_lea.vmem %s3, %s1471
        %s1473 = sand.u32 %s126, 1
        %s1474 = scalar_lea.sflag [#allocation3], %s1473
        %s1475 = sand.u32 %s126, 1
        %s1476 = smul.addr %s1475, 2
        %s1477 = scalar_lea.vmem [#allocation2], %s1476
        // Predicated region
        $region33: #{tpu_custom_call.1} parent=31 // pred_check
          %p1478 = pneg %p110
        $region34: #{tpu_custom_call.1} parent=31 // pred_check_branch
          %1480 = sbr.rel (%p1478) target = $region36
        $region35: #{tpu_custom_call.1} parent=31 // pred_region
          %s1481 = smul.u32 16, %s19
        $region36: #{tpu_custom_call.1} parent=31 // pred_fallthru
          _
        // Predicated region
        $region37: #{tpu_custom_call.1} parent=31 // pred_check
          %p1482 = pneg %p136
        $region38: #{tpu_custom_call.1} parent=31 // pred_check_branch
          %1484 = sbr.rel (%p1482) target = $region40
        $region39: #{tpu_custom_call.1} parent=31 // pred_region
          %s1486 = ssub.s32 32, 32
          %1487 = vsyncadd %s1474, %s1486
          %s1488 = smul.addr %s19, 32
          %s1489 = scalar_lea.hbm %s4, %s1488
          %s1491 = sshll.u32 %s1477, 4
          %s1492 = int_to_ptr.vmem [resolvable:$true] %s1491
          %1494 = dma.vmem_to_hbm [thread:$0]  %s1492, 32, %s1489, %s1474
        $region40: #{tpu_custom_call.1} parent=31 // pred_fallthru
          _
      $region32: #{tpu_custom_call.1} parent=5 // pred_fallthru
        _
      %p1495 = scmp.le.s32.totalorder 2, %s14
      // Predicated region
      $region41: #{tpu_custom_call.1} parent=5 // pred_check
        %p1496 = pneg %p1495
      $region42: #{tpu_custom_call.1} parent=5 // pred_check_branch
        %1498 = sbr.rel (%p1496) target = $region44
      $region43: #{tpu_custom_call.1} parent=5 // pred_region
        %s1499 = ssub.s32 %s14, 2
        // Predicated region
        $region45: #{tpu_custom_call.1} parent=43 // pred_check
          %p1500 = pneg %p116
        $region46: #{tpu_custom_call.1} parent=43 // pred_check_branch
          %1502 = sbr.rel (%p1500) target = $region48
        $region47: #{tpu_custom_call.1} parent=43 // pred_region
          %s1503 = smul.u32 16, %s20
          %p1504 = scmp.lt.s32.totalorder %s1503, 31
          %s1505 = scalar_select %p1504, %s1503, 31
          %s1506 = smul.addr %s1505, 4
          %s1507 = scalar_lea.vmem %s3, %s1506
        $region48: #{tpu_custom_call.1} parent=43 // pred_fallthru
          _
        // Predicated region
        $region49: #{tpu_custom_call.1} parent=43 // pred_check
          %p1508 = pneg %p142
        $region50: #{tpu_custom_call.1} parent=43 // pred_check_branch
          %1510 = sbr.rel (%p1508) target = $region52
        $region51: #{tpu_custom_call.1} parent=43 // pred_region
          %s1511 = sand.u32 %s127, 1
          %s1512 = scalar_lea.sflag [#allocation3], %s1511
          %s1513 = sand.u32 %s127, 1
          %s1514 = smul.addr %s1513, 2
          %s1515 = scalar_lea.vmem [#allocation2], %s1514
          %1516 = dma.done %s1512, 32
        $region52: #{tpu_custom_call.1} parent=43 // pred_fallthru
          _
      $region44: #{tpu_custom_call.1} parent=5 // pred_fallthru
        _
    $region6: #{tpu_custom_call.1} parent=1 // loop_footer
      %s18 = sadd.s32 1, %s14
    $region7: #{tpu_custom_call.1} parent=1 // loop_footer_branch
      %13 = sbr.rel target = $region3
    $region8: #{tpu_custom_call.1} parent=1 // loop_exit
      _
    %1517 = vsyncpa [#allocation3], 1
    %s1518 = scalar_lea.sflag [#allocation3], 1
    %1519 = vsyncpa %s1518, 1

</llo_original>
